<compile_context>
chip_gen: v6e
topology: v6e:2x2x1
jax: 0.10.0
libtpu: 0.0.40
codegen_flags: <defaults>
</compile_context>

<pallas_src>
import functools
import math

import jax
import jax.numpy as jnp
from jax import lax
from jax.experimental import pallas as pl
from jax.experimental.pallas import tpu as pltpu

LANE = 128


def _round_up(x, m):
    return ((x + m - 1) // m) * m


# ----------------------------------------------------------------------------
# In-kernel helpers
# ----------------------------------------------------------------------------

def _softmax_last(x, *, approx):
    # f32 softmax over the last axis.  approx=True routes the reciprocal to
    # the EUP slot; exact division is used where the result is user-visible.
    m = jnp.max(x, axis=-1, keepdims=True)
    e = jnp.exp(x - m)
    s = jnp.sum(e, axis=-1, keepdims=True)
    if approx:
        return e * pl.reciprocal(s, approx=True)
    return e / s


# ----------------------------------------------------------------------------
# Fused per-block forward kernel
# ----------------------------------------------------------------------------

def fused_forward_kernel(patches_ref, w_emb_ref, b_emb_ref, codes_ref,
                         vcmask_ref, pos_ref, w_dec_ref, b_dec_ref, *rest,
                         n_apply, hidden_pad, emit_prob,
                         scale_sel, scale_attn, scale_rec):
    if n_apply > 0:
        wqkv_ref, bqkv_ref, wo_ref, bo_ref = rest[:4]
        outs = rest[4:]
    else:
        outs = rest
    dec_ref = outs[0]
    prob_ref = outs[1] if emit_prob else None

    tb, L, Dp = patches_ref.shape
    ch = w_emb_ref.shape[1]
    K = codes_ref.shape[0]
    bf16 = jnp.bfloat16
    f32 = jnp.float32

    # --- NeuralConvSelection: patch embed (bf16 MXU, f32 accumulate) --------
    patches = patches_ref[...].reshape(tb * L, Dp).astype(bf16)   # M = TB*L
    feats = (jnp.dot(patches, w_emb_ref[...], preferred_element_type=f32)
             + b_emb_ref[...])                                    # (TB*L, ch)
    feats_b = feats.astype(bf16).reshape(tb, L, ch)

    # Dictionary cross-attention: softmax over each image's L patches.
    codes_b = jnp.broadcast_to(codes_ref[...], (tb, K, ch))
    scores = jnp.einsum('bkc,blc->bkl', codes_b, feats_b,
                        preferred_element_type=f32) * scale_sel   # (TB, K, L)
    p = _softmax_last(scores, approx=False)   # exact: user-visible probability
    if emit_prob:
        prob_ref[...] = p
    vcs = jnp.einsum('bkl,blc->bkc', p.astype(bf16), feats_b,
                     preferred_element_type=f32)                  # (TB, K, ch)
    vcs = vcs * vcmask_ref[...]                                   # concept mask

    # --- BatchedVectorAttention x sparse_vc_interaction (VMEM-resident) -----
    if n_apply > 0:
        def layer(i, vcs):
            vflat = vcs.astype(bf16).reshape(tb * K, ch)
            qkv = (jnp.dot(vflat, wqkv_ref[i], preferred_element_type=f32)
                   + bqkv_ref[i]).reshape(tb, K, 3 * hidden_pad)
            q = qkv[..., 0:hidden_pad].astype(bf16)               # 128-aligned
            k = qkv[..., hidden_pad:2 * hidden_pad].astype(bf16)  # lane slices
            v = qkv[..., 2 * hidden_pad:3 * hidden_pad].astype(bf16)
            att = jnp.einsum('bqh,bkh->bqk', q, k,
                             preferred_element_type=f32) * scale_attn
            att = _softmax_last(att, approx=True)
            out = jnp.einsum('bqk,bkh->bqh', att.astype(bf16), v,
                             preferred_element_type=f32)          # (TB, K, Hp)
            out = (jnp.dot(out.astype(bf16).reshape(tb * K, hidden_pad),
                           wo_ref[i], preferred_element_type=f32)
                   + bo_ref[i]).reshape(tb, K, ch)
            return vcs + out                                      # residual
        vcs = lax.fori_loop(0, n_apply, layer, vcs,
                            unroll=bool(n_apply <= 4))

    # --- NeuralConvRecon: positional cross-attention + patch decode ---------
    pos_b = jnp.broadcast_to(pos_ref[...], (tb, L, ch))
    scores2 = jnp.einsum('blc,bkc->blk', pos_b, vcs.astype(bf16),
                         preferred_element_type=f32) * scale_rec  # (TB, L, K)
    p2 = _softmax_last(scores2, approx=True)
    patch_feats = jnp.einsum('blk,bkc->blc', p2.astype(bf16), vcs.astype(bf16),
                             preferred_element_type=f32)          # (TB, L, ch)
    dec = (jnp.dot(patch_feats.astype(bf16).reshape(tb * L, ch), w_dec_ref[...],
                   preferred_element_type=f32)
           + b_dec_ref[...])                                      # (TB*L, Dp)
    dec_ref[...] = dec.reshape(tb, L, Dp)                         # lane-dense


# ----------------------------------------------------------------------------
# Wrapper: one pallas_call for the whole pipeline
# ----------------------------------------------------------------------------

def _pick_block_batch(n):
    # Images per grid step: enlarge the matmul M-dim while keeping >= 2 grid
    # steps (v7x has 2 TensorCores) and a small per-step VMEM footprint.
    if n <= 1:
        return 1
    return max(1, min(8, n // 2))


def fused_forward(patches, params, vc_mask, *, n_apply, emit_prob,
                  block_batch=None):
    n, L, Dp = patches.shape
    ch = params["w_embed"].shape[1]
    K = params["codes"].shape[0]
    hidden = max(ch // 5, 1)
    hidden_pad = params["attn_wo"].shape[1]
    nl = params["attn_wqkv"].shape[0]
    assert n_apply <= nl
    scale_sel = 1.0 / math.sqrt(ch)
    scale_rec = 1.0 / math.sqrt(ch)
    scale_attn = 1.0 / math.sqrt(hidden)

    tb = block_batch if block_batch is not None else _pick_block_batch(n)
    nb = pl.cdiv(n, tb)
    n_pad = nb * tb
    if n_pad != n:
        patches = jnp.pad(patches, ((0, n_pad - n), (0, 0), (0, 0)))

    in_specs = [
        pl.BlockSpec((tb, L, Dp), lambda b: (b, 0, 0)),       # patches (block)
        pl.BlockSpec((Dp, ch), lambda b: (0, 0)),             # w_embed
        pl.BlockSpec((1, ch), lambda b: (0, 0)),              # b_embed
        pl.BlockSpec((K, ch), lambda b: (0, 0)),              # codes
        pl.BlockSpec((K, 1), lambda b: (0, 0)),               # vc_mask
        pl.BlockSpec((L, ch), lambda b: (0, 0)),              # pos
        pl.BlockSpec((ch, Dp), lambda b: (0, 0)),             # w_dec
        pl.BlockSpec((1, Dp), lambda b: (0, 0)),              # b_dec
    ]
    args = [patches, params["w_embed"], params["b_embed"], params["codes"],
            vc_mask, params["pos"], params["w_dec"], params["b_dec"]]
    if n_apply > 0:
        th = 3 * hidden_pad
        in_specs += [
            pl.BlockSpec((nl, ch, th), lambda b: (0, 0, 0)),          # Wqkv
            pl.BlockSpec((nl, 1, th), lambda b: (0, 0, 0)),           # bqkv
            pl.BlockSpec((nl, hidden_pad, ch), lambda b: (0, 0, 0)),  # Wo
            pl.BlockSpec((nl, 1, ch), lambda b: (0, 0, 0)),           # bo
        ]
        args += [params["attn_wqkv"], params["attn_bqkv"],
                 params["attn_wo"], params["attn_bo"]]

    out_shape = [jax.ShapeDtypeStruct((n_pad, L, Dp), jnp.float32)]
    out_specs = [pl.BlockSpec((tb, L, Dp), lambda b: (b, 0, 0))]
    if emit_prob:
        out_shape.append(jax.ShapeDtypeStruct((n_pad, K, L), jnp.float32))
        out_specs.append(pl.BlockSpec((tb, K, L), lambda b: (b, 0, 0)))

    kernel = functools.partial(
        fused_forward_kernel, n_apply=n_apply, hidden_pad=hidden_pad,
        emit_prob=emit_prob, scale_sel=scale_sel, scale_attn=scale_attn,
        scale_rec=scale_rec)

    outs = pl.pallas_call(
        kernel,
        out_shape=tuple(out_shape),
        grid=(nb,),
        in_specs=in_specs,
        out_specs=tuple(out_specs),
        compiler_params=pltpu.CompilerParams(
            dimension_semantics=("parallel",),        # megacore: 1 block / TC
            vmem_limit_bytes=48 * 1024 * 1024,        # <= ~56 MiB (v7x headroom)
        ),
    )(*args)

    dec = outs[0][:n]
    prob = outs[1][:n] if emit_prob else None
    return dec, prob


# ----------------------------------------------------------------------------
# Glue: unfold / fold (non-overlapping patches, stride == kernel_size)
# ----------------------------------------------------------------------------

def unfold_patches(x, k):
    # x: [n, c, H, W] -> [n, L, c*k*k]  (channel-major, like F.unfold)
    n, c, H, W = x.shape
    hp, wp = H // k, W // k
    x = x.reshape(n, c, hp, k, wp, k)
    x = jnp.transpose(x, (0, 2, 4, 1, 3, 5))          # [n, hp, wp, c, k, k]
    return x.reshape(n, hp * wp, c * k * k)


def fold_patches(p, c, H, W, k):
    # p: [n, L, c*k*k] -> [n, c, H, W]
    n = p.shape[0]
    hp, wp = H // k, W // k
    x = p.reshape(n, hp, wp, c, k, k)
    x = jnp.transpose(x, (0, 3, 1, 4, 2, 5))          # [n, c, hp, k, wp, k]
    return x.reshape(n, c, H, W)


# ----------------------------------------------------------------------------
# Parameters (deterministic init, no checkpoint)
# ----------------------------------------------------------------------------

def init_params(key, ch, resolution, kernel_size, vc_dict_size, n_interact):
    D = ch * kernel_size * kernel_size
    Dp = _round_up(D, LANE)                      # lane-dense decode output
    L = (resolution // kernel_size) ** 2
    hidden = max(ch // 5, 1)
    Hp = _round_up(hidden, LANE)                 # lane-aligned q/k/v slices
    nl = max(n_interact, 1)
    keys = jax.random.split(key, 6)

    def dense(k, fan_in, shape):
        return jax.random.normal(k, shape, jnp.float32) / math.sqrt(fan_in)

    def pad_to(a, shape):
        return jnp.pad(a, [(0, t - s) for s, t in zip(a.shape, shape)])

    # Matmul weights stored in bf16 (MXU-native, halves weight DMA bytes).
    # Padded rows/cols are zero => padded compute equals the unpadded math.
    w_embed = pad_to(dense(keys[0], D, (D, ch)), (Dp, ch)).astype(jnp.bfloat16)
    w_dec = pad_to(dense(keys[3], ch, (ch, D)), (ch, Dp)).astype(jnp.bfloat16)
    wqkv = pad_to(dense(keys[4], ch, (nl, ch, 3, hidden)),
                  (nl, ch, 3, Hp)).reshape(nl, ch, 3 * Hp).astype(jnp.bfloat16)
    wo = pad_to(dense(keys[5], hidden, (nl, hidden, ch)),
                (nl, Hp, ch)).astype(jnp.bfloat16)

    return {
        "w_embed": w_embed,
        "b_embed": jnp.zeros((1, ch), jnp.float32),
        "codes": dense(keys[1], ch, (vc_dict_size, ch)).astype(jnp.bfloat16),
        "pos": dense(keys[2], ch, (L, ch)).astype(jnp.bfloat16),
        "w_dec": w_dec,
        "b_dec": jnp.zeros((1, Dp), jnp.float32),
        # BatchedVectorAttention: layers stacked, Q|K|V packed on the output
        # dim (one fused QKV matmul per layer inside the kernel).
        "attn_wqkv": wqkv,
        "attn_bqkv": jnp.zeros((nl, 1, 3 * Hp), jnp.float32),
        "attn_wo": wo,
        "attn_bo": jnp.zeros((nl, 1, ch), jnp.float32),
    }


# ----------------------------------------------------------------------------
# Forward pass == SparseNeuralConvMulti.forward
# ----------------------------------------------------------------------------

def sparse_neural_conv_multi_forward(x, params, *, ch, resolution, kernel_size,
                                     mode="1.0", sparse_vc_interaction=0,
                                     eval_=False, select_index=0):
    n = x.shape[0]
    D = ch * kernel_size * kernel_size
    Dp = params["w_embed"].shape[0]
    K = params["codes"].shape[0]

    patches = unfold_patches(x, kernel_size)                  # [n, L, D]
    if Dp != D:
        patches = jnp.pad(patches, ((0, 0), (0, 0), (0, Dp - D)))

    if mode == "1.0":
        if eval_:
            if isinstance(select_index, int):
                select_index = [select_index]
            vc_mask = jnp.zeros((K, 1), jnp.float32).at[
                jnp.asarray(select_index), 0].set(1.0)
        else:
            vc_mask = jnp.ones((K, 1), jnp.float32)

        dec, prob_vector = fused_forward(patches, params, vc_mask,
                                         n_apply=0, emit_prob=True)
        x_rec = fold_patches(dec[..., :D], ch, resolution, resolution,
                             kernel_size)

        # Auxiliary outputs.
        # TODO(synk): exact mask_x / previous_prob_vector / origin_map of
        #   NeuralConvSelection are unknown; these are consistent placeholders.
        hp = wp = resolution // kernel_size
        patch_conf = jnp.max(prob_vector, axis=1)             # (n, L)
        conf_map = jnp.broadcast_to(                          # nearest upsample
            patch_conf.reshape(n, 1, hp, 1, wp, 1),
            (n, 1, hp, kernel_size, wp, kernel_size),
        ).reshape(n, 1, resolution, resolution)
        mask_x = x * conf_map
        previous_prob_vector = prob_vector
        origin_map = jnp.argmax(prob_vector, axis=1).reshape(n, hp, wp)
        return x_rec, (mask_x, prob_vector, previous_prob_vector, origin_map)

    elif float(mode) >= 2.0:
        vc_mask = jnp.ones((K, 1), jnp.float32)
        # dec-only kernel variant: prob is discarded in this mode, so it is
        # never computed/written (pallas_call outputs cannot be DCE'd).
        dec, _ = fused_forward(patches, params, vc_mask,
                               n_apply=sparse_vc_interaction, emit_prob=False)
        x_rec = fold_patches(dec[..., :D], ch, resolution, resolution,
                             kernel_size)
        return x_rec, None
    else:
        raise ValueError(f"unsupported mode {mode}")


# ----------------------------------------------------------------------------
# Main
# ----------------------------------------------------------------------------

if __name__ == "__main__":
    n, ch, resolution, kernel_size, vc_dict_size = 4, 4, 16, 4, 8
    sparse_vc_interaction = 2

    key = jax.random.PRNGKey(0)
    kx, kp = jax.random.split(key)
    x = jax.random.normal(kx, (n, ch, resolution, resolution), jnp.float32)
    params = init_params(kp, ch, resolution, kernel_size, vc_dict_size,
                         sparse_vc_interaction)

    # mode '1.0' path (default in the PyTorch module)
    out1, aux1 = sparse_neural_conv_multi_forward(
        x, params, ch=ch, resolution=resolution, kernel_size=kernel_size,
        mode="1.0", sparse_vc_interaction=0)
    # mode '2.0' path with sparse_vc_interaction attention modules (in-kernel
    # fori_loop; dec-only output)
    out2, _ = sparse_neural_conv_multi_forward(
        x, params, ch=ch, resolution=resolution, kernel_size=kernel_size,
        mode="2.0", sparse_vc_interaction=sparse_vc_interaction)

    out1 = jax.block_until_ready(out1)
    out2 = jax.block_until_ready(out2)
    jax.block_until_ready(aux1)

    L = (resolution // kernel_size) ** 2
    assert out1.shape == x.shape and out1.dtype == x.dtype
    assert out2.shape == x.shape and out2.dtype == x.dtype
    assert aux1[1].shape == (n, vc_dict_size, L)

    print("KERNEL_OK")
</pallas_src>

<mosaic_0001>
module attributes {stable_mosaic.version = 11 : i64} {
  func.func @fused_forward_kernel(%arg0: i32, %arg1: memref<2x16x128xf32, #tpu.memory_space<vmem>>, %arg2: memref<128x4xbf16, #tpu.memory_space<vmem>>, %arg3: memref<1x4xf32, #tpu.memory_space<vmem>>, %arg4: memref<8x4xbf16, #tpu.memory_space<vmem>>, %arg5: memref<8x1xf32, #tpu.memory_space<vmem>>, %arg6: memref<16x4xbf16, #tpu.memory_space<vmem>>, %arg7: memref<4x128xbf16, #tpu.memory_space<vmem>>, %arg8: memref<1x128xf32, #tpu.memory_space<vmem>>, %arg9: memref<2x16x128xf32, #tpu.memory_space<vmem>>, %arg10: memref<2x8x16xf32, #tpu.memory_space<vmem>>) attributes {dimension_semantics = [#tpu.dimension_semantics<parallel>], iteration_bounds = array<i64: 2>, scalar_prefetch = 0 : i64, scratch_operands = 0 : i64, tpu.core_type = #tpu.core_type<tc>, window_params = [{transform_indices = @transform_0, window_bounds = array<i64: 2, 16, 128>}, {pipeline_mode = #tpu.pipeline_mode<synchronous>, transform_indices = @transform_1, window_bounds = array<i64: 128, 4>}, {pipeline_mode = #tpu.pipeline_mode<synchronous>, transform_indices = @transform_2, window_bounds = array<i64: 1, 4>}, {pipeline_mode = #tpu.pipeline_mode<synchronous>, transform_indices = @transform_3, window_bounds = array<i64: 8, 4>}, {pipeline_mode = #tpu.pipeline_mode<synchronous>, transform_indices = @transform_4, window_bounds = array<i64: 8, 1>}, {pipeline_mode = #tpu.pipeline_mode<synchronous>, transform_indices = @transform_5, window_bounds = array<i64: 16, 4>}, {pipeline_mode = #tpu.pipeline_mode<synchronous>, transform_indices = @transform_6, window_bounds = array<i64: 4, 128>}, {pipeline_mode = #tpu.pipeline_mode<synchronous>, transform_indices = @transform_7, window_bounds = array<i64: 1, 128>}, {transform_indices = @transform_8, window_bounds = array<i64: 2, 16, 128>}, {transform_indices = @transform_9, window_bounds = array<i64: 2, 8, 16>}]} {
    %c0 = arith.constant 0 : index
    %c0_0 = arith.constant 0 : index
    %c0_1 = arith.constant 0 : index
    %0 = vector.load %arg1[%c0, %c0_0, %c0_1] : memref<2x16x128xf32, #tpu.memory_space<vmem>>, vector<2x16x128xf32>
    %1 = vector.shape_cast %0 : vector<2x16x128xf32> to vector<32x128xf32>
    %2 = arith.truncf %1 : vector<32x128xf32> to vector<32x128xbf16>
    %c0_2 = arith.constant 0 : index
    %c0_3 = arith.constant 0 : index
    %3 = vector.load %arg2[%c0_2, %c0_3] : memref<128x4xbf16, #tpu.memory_space<vmem>>, vector<128x4xbf16>
    %cst = arith.constant dense<0.000000e+00> : vector<32x4xf32>
    %4 = tpu.matmul %2, %3, %cst {dimension_numbers = #tpu.dot_dimension_numbers<[1], [0], [0], [1], [0, 0, 1, 1], [], []>} : vector<32x128xbf16>, vector<128x4xbf16>, vector<32x4xf32> -> vector<32x4xf32>
    %c0_4 = arith.constant 0 : index
    %c0_5 = arith.constant 0 : index
    %5 = vector.load %arg3[%c0_4, %c0_5] : memref<1x4xf32, #tpu.memory_space<vmem>>, vector<1x4xf32>
    %6 = vector.broadcast %5 : vector<1x4xf32> to vector<32x4xf32>
    %7 = arith.addf %4, %6 : vector<32x4xf32>
    %8 = arith.truncf %7 : vector<32x4xf32> to vector<32x4xbf16>
    %9 = vector.shape_cast %8 : vector<32x4xbf16> to vector<2x16x4xbf16>
    %c0_6 = arith.constant 0 : index
    %c0_7 = arith.constant 0 : index
    %10 = vector.load %arg4[%c0_6, %c0_7] : memref<8x4xbf16, #tpu.memory_space<vmem>>, vector<8x4xbf16>
    %11 = vector.shape_cast %10 : vector<8x4xbf16> to vector<1x8x4xbf16>
    %12 = vector.broadcast %11 : vector<1x8x4xbf16> to vector<2x8x4xbf16>
    "tpu.trace_start"() <{level = 10 : i32, message = "bkc,blc->bkl"}> : () -> ()
    %cst_8 = arith.constant dense<0.000000e+00> : vector<2x8x16xf32>
    %13 = tpu.matmul %12, %9, %cst_8 {dimension_numbers = #tpu.dot_dimension_numbers<[2], [2], [1], [1], [0, 0, 0, 1, 1, 1], [0], [0]>} : vector<2x8x4xbf16>, vector<2x16x4xbf16>, vector<2x8x16xf32> -> vector<2x8x16xf32>
    "tpu.trace_stop"() : () -> ()
    %cst_9 = arith.constant 5.000000e-01 : f32
    %14 = vector.broadcast %cst_9 : f32 to vector<2x8x16xf32>
    %15 = arith.mulf %13, %14 : vector<2x8x16xf32>
    %cst_10 = arith.constant dense<0xFF800000> : vector<2x8xf32>
    %16 = vector.multi_reduction <maximumf>, %15, %cst_10 [2] : vector<2x8x16xf32> to vector<2x8xf32>
    %17 = vector.shape_cast %16 : vector<2x8xf32> to vector<2x8x1xf32>
    %18 = vector.broadcast %17 : vector<2x8x1xf32> to vector<2x8x16xf32>
    %19 = arith.subf %15, %18 : vector<2x8x16xf32>
    %20 = math.exp %19 : vector<2x8x16xf32>
    %cst_11 = arith.constant dense<0.000000e+00> : vector<2x8xf32>
    %21 = vector.multi_reduction <add>, %20, %cst_11 [2] : vector<2x8x16xf32> to vector<2x8xf32>
    %22 = vector.shape_cast %21 : vector<2x8xf32> to vector<2x8x1xf32>
    %23 = vector.broadcast %22 : vector<2x8x1xf32> to vector<2x8x16xf32>
    %24 = arith.divf %20, %23 : vector<2x8x16xf32>
    %c0_12 = arith.constant 0 : index
    %c0_13 = arith.constant 0 : index
    %c0_14 = arith.constant 0 : index
    %25 = vector.load %arg10[%c0_12, %c0_13, %c0_14] : memref<2x8x16xf32, #tpu.memory_space<vmem>>, vector<2x8x16xf32>
    tpu.vector_store %arg10[%c0_12, %c0_13, %c0_14], %24 {strides = array<i32>} : memref<2x8x16xf32, #tpu.memory_space<vmem>>, vector<2x8x16xf32>,
    %26 = arith.truncf %24 : vector<2x8x16xf32> to vector<2x8x16xbf16>
    "tpu.trace_start"() <{level = 10 : i32, message = "bkl,blc->bkc"}> : () -> ()
    %cst_15 = arith.constant dense<0.000000e+00> : vector<2x8x4xf32>
    %27 = tpu.matmul %26, %9, %cst_15 {dimension_numbers = #tpu.dot_dimension_numbers<[2], [1], [1], [2], [0, 0, 0, 1, 1, 2], [0], [0]>} : vector<2x8x16xbf16>, vector<2x16x4xbf16>, vector<2x8x4xf32> -> vector<2x8x4xf32>
    "tpu.trace_stop"() : () -> ()
    %c0_16 = arith.constant 0 : index
    %c0_17 = arith.constant 0 : index
    %28 = vector.load %arg5[%c0_16, %c0_17] : memref<8x1xf32, #tpu.memory_space<vmem>>, vector<8x1xf32>
    %29 = vector.shape_cast %28 : vector<8x1xf32> to vector<1x8x1xf32>
    %30 = vector.broadcast %29 : vector<1x8x1xf32> to vector<2x8x4xf32>
    %31 = arith.mulf %27, %30 : vector<2x8x4xf32>
    %c0_18 = arith.constant 0 : index
    %c0_19 = arith.constant 0 : index
    %32 = vector.load %arg6[%c0_18, %c0_19] : memref<16x4xbf16, #tpu.memory_space<vmem>>, vector<16x4xbf16>
    %33 = vector.shape_cast %32 : vector<16x4xbf16> to vector<1x16x4xbf16>
    %34 = vector.broadcast %33 : vector<1x16x4xbf16> to vector<2x16x4xbf16>
    %35 = arith.truncf %31 : vector<2x8x4xf32> to vector<2x8x4xbf16>
    "tpu.trace_start"() <{level = 10 : i32, message = "blc,bkc->blk"}> : () -> ()
    %cst_20 = arith.constant dense<0.000000e+00> : vector<2x16x8xf32>
    %36 = tpu.matmul %34, %35, %cst_20 {dimension_numbers = #tpu.dot_dimension_numbers<[2], [2], [1], [1], [0, 0, 0, 1, 1, 1], [0], [0]>} : vector<2x16x4xbf16>, vector<2x8x4xbf16>, vector<2x16x8xf32> -> vector<2x16x8xf32>
    "tpu.trace_stop"() : () -> ()
    %cst_21 = arith.constant 5.000000e-01 : f32
    %37 = vector.broadcast %cst_21 : f32 to vector<2x16x8xf32>
    %38 = arith.mulf %36, %37 : vector<2x16x8xf32>
    %cst_22 = arith.constant dense<0xFF800000> : vector<2x16xf32>
    %39 = vector.multi_reduction <maximumf>, %38, %cst_22 [2] : vector<2x16x8xf32> to vector<2x16xf32>
    %40 = vector.shape_cast %39 : vector<2x16xf32> to vector<2x16x1xf32>
    %41 = vector.broadcast %40 : vector<2x16x1xf32> to vector<2x16x8xf32>
    %42 = arith.subf %38, %41 : vector<2x16x8xf32>
    %43 = math.exp %42 : vector<2x16x8xf32>
    %cst_23 = arith.constant dense<0.000000e+00> : vector<2x16xf32>
    %44 = vector.multi_reduction <add>, %43, %cst_23 [2] : vector<2x16x8xf32> to vector<2x16xf32>
    %45 = vector.shape_cast %44 : vector<2x16xf32> to vector<2x16x1xf32>
    %46 = tpu.reciprocal %45 {approx = true} : vector<2x16x1xf32> -> vector<2x16x1xf32>
    %47 = vector.broadcast %46 : vector<2x16x1xf32> to vector<2x16x8xf32>
    %48 = arith.mulf %43, %47 : vector<2x16x8xf32>
    %49 = arith.truncf %48 : vector<2x16x8xf32> to vector<2x16x8xbf16>
    %50 = arith.truncf %31 : vector<2x8x4xf32> to vector<2x8x4xbf16>
    "tpu.trace_start"() <{level = 10 : i32, message = "blk,bkc->blc"}> : () -> ()
    %cst_24 = arith.constant dense<0.000000e+00> : vector<2x16x4xf32>
    %51 = tpu.matmul %49, %50, %cst_24 {dimension_numbers = #tpu.dot_dimension_numbers<[2], [1], [1], [2], [0, 0, 0, 1, 1, 2], [0], [0]>} : vector<2x16x8xbf16>, vector<2x8x4xbf16>, vector<2x16x4xf32> -> vector<2x16x4xf32>
    "tpu.trace_stop"() : () -> ()
    %52 = arith.truncf %51 : vector<2x16x4xf32> to vector<2x16x4xbf16>
    %53 = vector.shape_cast %52 : vector<2x16x4xbf16> to vector<32x4xbf16>
    %c0_25 = arith.constant 0 : index
    %c0_26 = arith.constant 0 : index
    %54 = vector.load %arg7[%c0_25, %c0_26] : memref<4x128xbf16, #tpu.memory_space<vmem>>, vector<4x128xbf16>
    %cst_27 = arith.constant dense<0.000000e+00> : vector<32x128xf32>
    %55 = tpu.matmul %53, %54, %cst_27 {dimension_numbers = #tpu.dot_dimension_numbers<[1], [0], [0], [1], [0, 0, 1, 1], [], []>} : vector<32x4xbf16>, vector<4x128xbf16>, vector<32x128xf32> -> vector<32x128xf32>
    %c0_28 = arith.constant 0 : index
    %c0_29 = arith.constant 0 : index
    %56 = vector.load %arg8[%c0_28, %c0_29] : memref<1x128xf32, #tpu.memory_space<vmem>>, vector<1x128xf32>
    %57 = vector.broadcast %56 : vector<1x128xf32> to vector<32x128xf32>
    %58 = arith.addf %55, %57 : vector<32x128xf32>
    %59 = vector.shape_cast %58 : vector<32x128xf32> to vector<2x16x128xf32>
    %c0_30 = arith.constant 0 : index
    %c0_31 = arith.constant 0 : index
    %c0_32 = arith.constant 0 : index
    %60 = vector.load %arg9[%c0_30, %c0_31, %c0_32] : memref<2x16x128xf32, #tpu.memory_space<vmem>>, vector<2x16x128xf32>
    tpu.vector_store %arg9[%c0_30, %c0_31, %c0_32], %59 {strides = array<i32>} : memref<2x16x128xf32, #tpu.memory_space<vmem>>, vector<2x16x128xf32>,
    return
  }
  func.func @transform_0(%arg0: i32) -> (i32, i32, i32) {
    %c0_i32 = arith.constant 0 : i32
    %c0_i32_0 = arith.constant 0 : i32
    %c0_i32_1 = arith.constant 0 : i32
    return %arg0, %c0_i32, %c0_i32_0 : i32, i32, i32
  }
  func.func @transform_1(%arg0: i32) -> (i32, i32) {
    %c0_i32 = arith.constant 0 : i32
    %c0_i32_0 = arith.constant 0 : i32
    %c0_i32_1 = arith.constant 0 : i32
    return %c0_i32, %c0_i32_0 : i32, i32
  }
  func.func @transform_2(%arg0: i32) -> (i32, i32) {
    %c0_i32 = arith.constant 0 : i32
    %c0_i32_0 = arith.constant 0 : i32
    %c0_i32_1 = arith.constant 0 : i32
    return %c0_i32, %c0_i32_0 : i32, i32
  }
  func.func @transform_3(%arg0: i32) -> (i32, i32) {
    %c0_i32 = arith.constant 0 : i32
    %c0_i32_0 = arith.constant 0 : i32
    %c0_i32_1 = arith.constant 0 : i32
    return %c0_i32, %c0_i32_0 : i32, i32
  }
  func.func @transform_4(%arg0: i32) -> (i32, i32) {
    %c0_i32 = arith.constant 0 : i32
    %c0_i32_0 = arith.constant 0 : i32
    %c0_i32_1 = arith.constant 0 : i32
    return %c0_i32, %c0_i32_0 : i32, i32
  }
  func.func @transform_5(%arg0: i32) -> (i32, i32) {
    %c0_i32 = arith.constant 0 : i32
    %c0_i32_0 = arith.constant 0 : i32
    %c0_i32_1 = arith.constant 0 : i32
    return %c0_i32, %c0_i32_0 : i32, i32
  }
  func.func @transform_6(%arg0: i32) -> (i32, i32) {
    %c0_i32 = arith.constant 0 : i32
    %c0_i32_0 = arith.constant 0 : i32
    %c0_i32_1 = arith.constant 0 : i32
    return %c0_i32, %c0_i32_0 : i32, i32
  }
  func.func @transform_7(%arg0: i32) -> (i32, i32) {
    %c0_i32 = arith.constant 0 : i32
    %c0_i32_0 = arith.constant 0 : i32
    %c0_i32_1 = arith.constant 0 : i32
    return %c0_i32, %c0_i32_0 : i32, i32
  }
  func.func @transform_8(%arg0: i32) -> (i32, i32, i32) {
    %c0_i32 = arith.constant 0 : i32
    %c0_i32_0 = arith.constant 0 : i32
    %c0_i32_1 = arith.constant 0 : i32
    return %arg0, %c0_i32, %c0_i32_0 : i32, i32, i32
  }
  func.func @transform_9(%arg0: i32) -> (i32, i32, i32) {
    %c0_i32 = arith.constant 0 : i32
    %c0_i32_0 = arith.constant 0 : i32
    %c0_i32_1 = arith.constant 0 : i32
    return %arg0, %c0_i32, %c0_i32_0 : i32, i32, i32
  }
}

</mosaic_0001>

<llo_original>
// kernel: tpu_custom_call.1
$region0: #{tpu_custom_call.1}
  #allocation0 [shape = 'u32[]', space=smem, size = 0x4, offset = 0x4, fixed_abs, tag = 'smem constant byte address 0x4 - core index']
  #allocation1 [shape = 'u32[144,128]{1,0:T(1,128)}', space=vmem, size = 0x12000, scoped, tag = 'internal scratch']
  %s0 = inlined_call_operand.vmem [shape: f32[4,16,128], index: 0, kind: input, shape index: {}]
  %s1 = inlined_call_operand.vmem [shape: bf16[128,4], index: 1, kind: input, shape index: {}]
  %s2 = inlined_call_operand.vmem [shape: f32[1,4], index: 2, kind: input, shape index: {}]
  %s3 = inlined_call_operand.vmem [shape: bf16[8,4], index: 3, kind: input, shape index: {}]
  %s4 = inlined_call_operand.vmem [shape: f32[8,1], index: 4, kind: input, shape index: {}]
  %s5 = inlined_call_operand.vmem [shape: bf16[16,4], index: 5, kind: input, shape index: {}]
  %s6 = inlined_call_operand.vmem [shape: bf16[4,128], index: 6, kind: input, shape index: {}]
  %s7 = inlined_call_operand.vmem [shape: f32[1,128], index: 7, kind: input, shape index: {}]
  %s8 = inlined_call_operand.hbm [shape: f32[4,16,128], index: 8, kind: output, shape index: {0}]
  %s9 = inlined_call_operand.hbm [shape: f32[4,8,16], index: 9, kind: output, shape index: {1}]
  %10 = xla_tuple %s8, %s9
  %s11 = sld [smem:[#allocation0]]
  $region73: #{tpu_custom_call.1} parent=0
    _
  %s13 = ssub.s32 1, %s11
  %s14 = scalar_select 0, %s13, %s11
  $region1: #{tpu_custom_call.1} parent=0
    #allocation2 [shape = 'u8[32768]{0}', space=vmem, size = 0x8000, scoped, tag = 'output window, operand 0']
    #allocation3 [shape = 's32[2]{0}', space=sflag, size = 0x8, scoped, tag = 'scoped memory for tpu_custom_call.1']
    #allocation4 [shape = 'u8[16384]{0}', space=vmem, size = 0x4000, scoped, tag = 'output window, operand 1']
    #allocation5 [shape = 's32[2]{0}', space=sflag, size = 0x8, scoped, tag = 'scoped memory for tpu_custom_call.1']
    %15 = vsyncpa [#allocation3], 0
    %s16 = scalar_lea.sflag [#allocation3], 1
    %17 = vsyncpa %s16, 0
    %18 = vsyncpa [#allocation5], 0
    %s19 = scalar_lea.sflag [#allocation5], 1
    %20 = vsyncpa %s19, 0
    loop: start=0, step=1, limit=4
    $region2: #{tpu_custom_call.1} parent=1 // loop_pre_header
      _
    $region3: #{tpu_custom_call.1} parent=1 // loop_header
      %s22 = sphi 0, %s26
      %p23 = scmp.ge.s32.totalorder %s22, 4
      %s32 = sphi 0, %s34
      %s35 = sphi 0, %s32
      %s36 = sphi 0, %s35
      %s52 = sphi 0, %s36
      %s56 = sphi 0, %s56
      %s58 = sphi 0, %s56
      %s59 = sphi 0, %s58
      %s73 = sphi 0, %s59
      %s77 = sphi 0, %s77
      %s79 = sphi 0, %s77
      %s80 = sphi 0, %s79
      %s94 = sphi 0, %s80
      %s98 = sphi 0, %s98
      %s100 = sphi 0, %s98
      %s101 = sphi 0, %s100
      %s115 = sphi 0, %s101
      %s119 = sphi 0, %s119
      %s121 = sphi 0, %s119
      %s122 = sphi 0, %s121
      %s136 = sphi 0, %s122
      %s140 = sphi 0, %s140
      %s142 = sphi 0, %s140
      %s143 = sphi 0, %s142
      %s157 = sphi 0, %s143
      %s161 = sphi 0, %s161
      %s163 = sphi 0, %s161
      %s164 = sphi 0, %s163
      %s178 = sphi 0, %s164
      %s182 = sphi 0, %s182
      %s184 = sphi 0, %s182
      %s185 = sphi 0, %s184
      %s199 = sphi 0, %s185
      %s205 = sphi 0, %s207
      %s208 = sphi 0, %s205
      %s209 = sphi 0, %s208
      %s225 = sphi 0, %s209
      %s231 = sphi 0, %s233
      %s234 = sphi 0, %s231
      %s235 = sphi 0, %s234
      %s251 = sphi 0, %s235
    $region4: #{tpu_custom_call.1} parent=1 // loop_header_branch
      %25 = sbr.rel (%p23) target = $region8
    $region5: #{tpu_custom_call.1} parent=1 // loop_body
      %s27 = ssub.s32 %s22, 1
      %s28 = ssub.s32 %s22, 2
      %s29 = sadd.s32 %s22, 1
      %s30 = ssub.s32 %s22, %s29
      %p31 = scmp.eq.s32.totalorder %s30, 0
      %s33 = sadd.s32 %s32, 1
      %s34 = scalar_select %p31, %s32, %s33
      %p37 = pneg %p31
      %p38 = scmp.eq.s32.totalorder %s22, 1
      %p39 = por %p37, %p38
      %p40 = scmp.ne.s32.totalorder %s32, %s35
      %p41 = scmp.eq.s32.totalorder %s22, 0
      %p42 = por %p40, %p41
      %p43 = scmp.ne.s32.totalorder %s32, %s35
      %p44 = scmp.eq.s32.totalorder %s27, 1
      %p45 = por %p43, %p44
      %p46 = scmp.ne.s32.totalorder %s35, %s36
      %p47 = scmp.eq.s32.totalorder %s27, 0
      %p48 = por %p46, %p47
      %p49 = scmp.ne.s32.totalorder %s35, %s36
      %p50 = scmp.eq.s32.totalorder %s28, 1
      %p51 = por %p49, %p50
      %p53 = scmp.ne.s32.totalorder %s36, %s52
      %p54 = scmp.eq.s32.totalorder %s28, 0
      %p55 = por %p53, %p54
      %s57 = sadd.s32 %s56, 1
      %p60 = scmp.eq.s32.totalorder %s22, 1
      %p61 = scmp.ne.s32.totalorder %s56, %s58
      %p62 = scmp.eq.s32.totalorder %s22, 0
      %p63 = por %p61, %p62
      %p64 = scmp.ne.s32.totalorder %s56, %s58
      %p65 = scmp.eq.s32.totalorder %s27, 1
      %p66 = por %p64, %p65
      %p67 = scmp.ne.s32.totalorder %s58, %s59
      %p68 = scmp.eq.s32.totalorder %s27, 0
      %p69 = por %p67, %p68
      %p70 = scmp.ne.s32.totalorder %s58, %s59
      %p71 = scmp.eq.s32.totalorder %s28, 1
      %p72 = por %p70, %p71
      %p74 = scmp.ne.s32.totalorder %s59, %s73
      %p75 = scmp.eq.s32.totalorder %s28, 0
      %p76 = por %p74, %p75
      %s78 = sadd.s32 %s77, 1
      %p81 = scmp.eq.s32.totalorder %s22, 1
      %p82 = scmp.ne.s32.totalorder %s77, %s79
      %p83 = scmp.eq.s32.totalorder %s22, 0
      %p84 = por %p82, %p83
      %p85 = scmp.ne.s32.totalorder %s77, %s79
      %p86 = scmp.eq.s32.totalorder %s27, 1
      %p87 = por %p85, %p86
      %p88 = scmp.ne.s32.totalorder %s79, %s80
      %p89 = scmp.eq.s32.totalorder %s27, 0
      %p90 = por %p88, %p89
      %p91 = scmp.ne.s32.totalorder %s79, %s80
      %p92 = scmp.eq.s32.totalorder %s28, 1
      %p93 = por %p91, %p92
      %p95 = scmp.ne.s32.totalorder %s80, %s94
      %p96 = scmp.eq.s32.totalorder %s28, 0
      %p97 = por %p95, %p96
      %s99 = sadd.s32 %s98, 1
      %p102 = scmp.eq.s32.totalorder %s22, 1
      %p103 = scmp.ne.s32.totalorder %s98, %s100
      %p104 = scmp.eq.s32.totalorder %s22, 0
      %p105 = por %p103, %p104
      %p106 = scmp.ne.s32.totalorder %s98, %s100
      %p107 = scmp.eq.s32.totalorder %s27, 1
      %p108 = por %p106, %p107
      %p109 = scmp.ne.s32.totalorder %s100, %s101
      %p110 = scmp.eq.s32.totalorder %s27, 0
      %p111 = por %p109, %p110
      %p112 = scmp.ne.s32.totalorder %s100, %s101
      %p113 = scmp.eq.s32.totalorder %s28, 1
      %p114 = por %p112, %p113
      %p116 = scmp.ne.s32.totalorder %s101, %s115
      %p117 = scmp.eq.s32.totalorder %s28, 0
      %p118 = por %p116, %p117
      %s120 = sadd.s32 %s119, 1
      %p123 = scmp.eq.s32.totalorder %s22, 1
      %p124 = scmp.ne.s32.totalorder %s119, %s121
      %p125 = scmp.eq.s32.totalorder %s22, 0
      %p126 = por %p124, %p125
      %p127 = scmp.ne.s32.totalorder %s119, %s121
      %p128 = scmp.eq.s32.totalorder %s27, 1
      %p129 = por %p127, %p128
      %p130 = scmp.ne.s32.totalorder %s121, %s122
      %p131 = scmp.eq.s32.totalorder %s27, 0
      %p132 = por %p130, %p131
      %p133 = scmp.ne.s32.totalorder %s121, %s122
      %p134 = scmp.eq.s32.totalorder %s28, 1
      %p135 = por %p133, %p134
      %p137 = scmp.ne.s32.totalorder %s122, %s136
      %p138 = scmp.eq.s32.totalorder %s28, 0
      %p139 = por %p137, %p138
      %s141 = sadd.s32 %s140, 1
      %p144 = scmp.eq.s32.totalorder %s22, 1
      %p145 = scmp.ne.s32.totalorder %s140, %s142
      %p146 = scmp.eq.s32.totalorder %s22, 0
      %p147 = por %p145, %p146
      %p148 = scmp.ne.s32.totalorder %s140, %s142
      %p149 = scmp.eq.s32.totalorder %s27, 1
      %p150 = por %p148, %p149
      %p151 = scmp.ne.s32.totalorder %s142, %s143
      %p152 = scmp.eq.s32.totalorder %s27, 0
      %p153 = por %p151, %p152
      %p154 = scmp.ne.s32.totalorder %s142, %s143
      %p155 = scmp.eq.s32.totalorder %s28, 1
      %p156 = por %p154, %p155
      %p158 = scmp.ne.s32.totalorder %s143, %s157
      %p159 = scmp.eq.s32.totalorder %s28, 0
      %p160 = por %p158, %p159
      %s162 = sadd.s32 %s161, 1
      %p165 = scmp.eq.s32.totalorder %s22, 1
      %p166 = scmp.ne.s32.totalorder %s161, %s163
      %p167 = scmp.eq.s32.totalorder %s22, 0
      %p168 = por %p166, %p167
      %p169 = scmp.ne.s32.totalorder %s161, %s163
      %p170 = scmp.eq.s32.totalorder %s27, 1
      %p171 = por %p169, %p170
      %p172 = scmp.ne.s32.totalorder %s163, %s164
      %p173 = scmp.eq.s32.totalorder %s27, 0
      %p174 = por %p172, %p173
      %p175 = scmp.ne.s32.totalorder %s163, %s164
      %p176 = scmp.eq.s32.totalorder %s28, 1
      %p177 = por %p175, %p176
      %p179 = scmp.ne.s32.totalorder %s164, %s178
      %p180 = scmp.eq.s32.totalorder %s28, 0
      %p181 = por %p179, %p180
      %s183 = sadd.s32 %s182, 1
      %p186 = scmp.eq.s32.totalorder %s22, 1
      %p187 = scmp.ne.s32.totalorder %s182, %s184
      %p188 = scmp.eq.s32.totalorder %s22, 0
      %p189 = por %p187, %p188
      %p190 = scmp.ne.s32.totalorder %s182, %s184
      %p191 = scmp.eq.s32.totalorder %s27, 1
      %p192 = por %p190, %p191
      %p193 = scmp.ne.s32.totalorder %s184, %s185
      %p194 = scmp.eq.s32.totalorder %s27, 0
      %p195 = por %p193, %p194
      %p196 = scmp.ne.s32.totalorder %s184, %s185
      %p197 = scmp.eq.s32.totalorder %s28, 1
      %p198 = por %p196, %p197
      %p200 = scmp.ne.s32.totalorder %s185, %s199
      %p201 = scmp.eq.s32.totalorder %s28, 0
      %p202 = por %p200, %p201
      %s203 = ssub.s32 %s22, %s29
      %p204 = scmp.eq.s32.totalorder %s203, 0
      %s206 = sadd.s32 %s205, 1
      %s207 = scalar_select %p204, %s205, %s206
      %p210 = pneg %p204
      %p211 = scmp.eq.s32.totalorder %s22, 1
      %p212 = por %p210, %p211
      %p213 = scmp.ne.s32.totalorder %s205, %s208
      %p214 = scmp.eq.s32.totalorder %s22, 0
      %p215 = por %p213, %p214
      %p216 = scmp.ne.s32.totalorder %s205, %s208
      %p217 = scmp.eq.s32.totalorder %s27, 1
      %p218 = por %p216, %p217
      %p219 = scmp.ne.s32.totalorder %s208, %s209
      %p220 = scmp.eq.s32.totalorder %s27, 0
      %p221 = por %p219, %p220
      %p222 = scmp.ne.s32.totalorder %s208, %s209
      %p223 = scmp.eq.s32.totalorder %s28, 1
      %p224 = por %p222, %p223
      %p226 = scmp.ne.s32.totalorder %s209, %s225
      %p227 = scmp.eq.s32.totalorder %s28, 0
      %p228 = por %p226, %p227
      %s229 = ssub.s32 %s22, %s29
      %p230 = scmp.eq.s32.totalorder %s229, 0
      %s232 = sadd.s32 %s231, 1
      %s233 = scalar_select %p230, %s231, %s232
      %p236 = pneg %p230
      %p237 = scmp.eq.s32.totalorder %s22, 1
      %p238 = por %p236, %p237
      %p239 = scmp.ne.s32.totalorder %s231, %s234
      %p240 = scmp.eq.s32.totalorder %s22, 0
      %p241 = por %p239, %p240
      %p242 = scmp.ne.s32.totalorder %s231, %s234
      %p243 = scmp.eq.s32.totalorder %s27, 1
      %p244 = por %p242, %p243
      %p245 = scmp.ne.s32.totalorder %s234, %s235
      %p246 = scmp.eq.s32.totalorder %s27, 0
      %p247 = por %p245, %p246
      %p248 = scmp.ne.s32.totalorder %s234, %s235
      %p249 = scmp.eq.s32.totalorder %s28, 1
      %p250 = por %p248, %p249
      %p252 = scmp.ne.s32.totalorder %s235, %s251
      %p253 = scmp.eq.s32.totalorder %s28, 0
      %p254 = por %p252, %p253
      %p255 = scmp.le.s32.totalorder 1, %s22
      %p256 = scmp.lt.s32.totalorder %s22, 3
      %p257 = pnand %p255, %p256
      %p258 = pneg %p257
      // Predicated region
      $region9: #{tpu_custom_call.1} parent=5 // pred_check
        _
      $region10: #{tpu_custom_call.1} parent=5 // pred_check_branch
        %260 = sbr.rel (%p257) target = $region12
      $region11: #{tpu_custom_call.1} parent=5 // pred_region
        %s261 = ssub.s32 %s22, 1
        // Predicated region
        $region13: #{tpu_custom_call.1} parent=11 // pred_check
          %p262 = pneg %p69
        $region14: #{tpu_custom_call.1} parent=11 // pred_check_branch
          %264 = sbr.rel (%p262) target = $region16
        $region15: #{tpu_custom_call.1} parent=11 // pred_region
          _
        $region16: #{tpu_custom_call.1} parent=11 // pred_fallthru
          _
        // Predicated region
        $region17: #{tpu_custom_call.1} parent=11 // pred_check
          %p265 = pneg %p90
        $region18: #{tpu_custom_call.1} parent=11 // pred_check_branch
          %267 = sbr.rel (%p265) target = $region20
        $region19: #{tpu_custom_call.1} parent=11 // pred_region
          _
        $region20: #{tpu_custom_call.1} parent=11 // pred_fallthru
          _
        // Predicated region
        $region21: #{tpu_custom_call.1} parent=11 // pred_check
          %p268 = pneg %p111
        $region22: #{tpu_custom_call.1} parent=11 // pred_check_branch
          %270 = sbr.rel (%p268) target = $region24
        $region23: #{tpu_custom_call.1} parent=11 // pred_region
          _
        $region24: #{tpu_custom_call.1} parent=11 // pred_fallthru
          _
        // Predicated region
        $region25: #{tpu_custom_call.1} parent=11 // pred_check
          %p271 = pneg %p132
        $region26: #{tpu_custom_call.1} parent=11 // pred_check_branch
          %273 = sbr.rel (%p271) target = $region28
        $region27: #{tpu_custom_call.1} parent=11 // pred_region
          _
        $region28: #{tpu_custom_call.1} parent=11 // pred_fallthru
          _
        // Predicated region
        $region29: #{tpu_custom_call.1} parent=11 // pred_check
          %p274 = pneg %p153
        $region30: #{tpu_custom_call.1} parent=11 // pred_check_branch
          %276 = sbr.rel (%p274) target = $region32
        $region31: #{tpu_custom_call.1} parent=11 // pred_region
          _
        $region32: #{tpu_custom_call.1} parent=11 // pred_fallthru
          _
        // Predicated region
        $region33: #{tpu_custom_call.1} parent=11 // pred_check
          %p277 = pneg %p174
        $region34: #{tpu_custom_call.1} parent=11 // pred_check_branch
          %279 = sbr.rel (%p277) target = $region36
        $region35: #{tpu_custom_call.1} parent=11 // pred_region
          _
        $region36: #{tpu_custom_call.1} parent=11 // pred_fallthru
          _
        // Predicated region
        $region37: #{tpu_custom_call.1} parent=11 // pred_check
          %p280 = pneg %p195
        $region38: #{tpu_custom_call.1} parent=11 // pred_check_branch
          %282 = sbr.rel (%p280) target = $region40
        $region39: #{tpu_custom_call.1} parent=11 // pred_region
          _
        $region40: #{tpu_custom_call.1} parent=11 // pred_fallthru
          _
      $region12: #{tpu_custom_call.1} parent=5 // pred_fallthru
        _
      %p283 = scmp.lt.s32.totalorder %s22, 2
      // Predicated region
      $region41: #{tpu_custom_call.1} parent=5 // pred_check
        %p284 = pneg %p283
      $region42: #{tpu_custom_call.1} parent=5 // pred_check_branch
        %286 = sbr.rel (%p284) target = $region44
      $region43: #{tpu_custom_call.1} parent=5 // pred_region
        // Predicated region
        $region45: #{tpu_custom_call.1} parent=43 // pred_check
          %p287 = pneg %p42
        $region46: #{tpu_custom_call.1} parent=43 // pred_check_branch
          %289 = sbr.rel (%p287) target = $region48
        $region47: #{tpu_custom_call.1} parent=43 // pred_region
          %s290 = smul.u32 2, %s22
          %p291 = scmp.lt.s32.totalorder %s290, 3
          %s292 = scalar_select %p291, %s290, 3
          %s293 = smul.addr %s292, 2
          %s294 = smul.addr %s293, 8
          %s295 = scalar_lea.vmem %s0, %s294
          %s296 = smul.u32 2, %s22
        $region48: #{tpu_custom_call.1} parent=43 // pred_fallthru
          _
      $region44: #{tpu_custom_call.1} parent=5 // pred_fallthru
        _
      %p297 = scmp.le.s32.totalorder 1, %s22
      %p298 = scmp.lt.s32.totalorder %s22, 3
      %p299 = pnand %p297, %p298
      %p300 = pneg %p299
      // Predicated region
      $region49: #{tpu_custom_call.1} parent=5 // pred_check
        _
      $region50: #{tpu_custom_call.1} parent=5 // pred_check_branch
        %302 = sbr.rel (%p299) target = $region52
      $region51: #{tpu_custom_call.1} parent=5 // pred_region
        %s303 = ssub.s32 %s22, 1
        %s304 = smul.u32 2, %s27
        %p305 = scmp.lt.s32.totalorder %s304, 3
        %s306 = scalar_select %p305, %s304, 3
        %s307 = smul.addr %s306, 2
        %s308 = smul.addr %s307, 8
        %s309 = scalar_lea.vmem %s0, %s308
        %p310 = pneg %p48
        %p311 = pneg %p45
        %p312 = pneg %p69
        %p313 = pneg %p66
        %p314 = pneg %p90
        %p315 = pneg %p87
        %p316 = pneg %p111
        %p317 = pneg %p108
        %p318 = pneg %p132
        %p319 = pneg %p129
        %p320 = pneg %p153
        %p321 = pneg %p150
        %p322 = pneg %p174
        %p323 = pneg %p171
        %p324 = pneg %p195
        %p325 = pneg %p192
        %p326 = pneg %p221
        %p327 = pneg %p218
        %s328 = sand.u32 %s208, 1
        %s329 = scalar_lea.sflag [#allocation3], %s328
        %s330 = sand.u32 %s208, 1
        %s331 = smul.addr %s330, 32
        %s332 = scalar_lea.vmem [#allocation2], %s331
        %p333 = pneg %p247
        %p334 = pneg %p244
        %s335 = sand.u32 %s234, 1
        %s336 = scalar_lea.sflag [#allocation5], %s335
        %s337 = sand.u32 %s234, 1
        %s338 = smul.addr %s337, 16
        %s339 = scalar_lea.vmem [#allocation4], %s338
        %s340 = smul.u32 2, %s27
        %p341 = scmp.lt.s32.totalorder %s340, 3
        %s342 = scalar_select %p341, %s340, 3
        %s343 = smul.addr %s342, 2
        %s344 = smul.addr %s343, 8
        %s345 = scalar_lea.vmem %s0, %s344
        %s346 = smul.u32 2, %s27
        %s347 = smul.u32 2, %s27
        %s348 = smul.u32 2, %s27
        %v350 = vld [vmem:[%s345] sm:$0xff]
        %v351 = vld [vmem:[%s345 + $0x8] sm:$0xff]
        %v352 = vld [vmem:[%s345 + $0x10] sm:$0xff]
        %v353 = vld [vmem:[%s345 + $0x18] sm:$0xff]
        %v354 = vpack.c.bf16 %v351, %v350
        %v355 = vpack.c.bf16 %v353, %v352
        %v356 = vld [vmem:[%s1] sm:$0xf]
        %v357 = vld [vmem:[%s1 + $0x4] sm:$0xf]
        %v358 = vld [vmem:[%s1 + $0x8] sm:$0xf]
        %v359 = vld [vmem:[%s1 + $0xc] sm:$0xf]
        %v360 = vld [vmem:[%s1 + $0x10] sm:$0xf]
        %v361 = vld [vmem:[%s1 + $0x14] sm:$0xf]
        %v362 = vld [vmem:[%s1 + $0x18] sm:$0xf]
        %v363 = vld [vmem:[%s1 + $0x1c] sm:$0xf]
        %v364 = vld [vmem:[%s1 + $0x20] sm:$0xf]
        %v365 = vld [vmem:[%s1 + $0x24] sm:$0xf]
        %v366 = vld [vmem:[%s1 + $0x28] sm:$0xf]
        %v367 = vld [vmem:[%s1 + $0x2c] sm:$0xf]
        %v368 = vld [vmem:[%s1 + $0x30] sm:$0xf]
        %v369 = vld [vmem:[%s1 + $0x34] sm:$0xf]
        %v370 = vld [vmem:[%s1 + $0x38] sm:$0xf]
        %v371 = vld [vmem:[%s1 + $0x3c] sm:$0xf]
        %v372 = vld [vmem:[%s2] sm:$0x1]
        %v374 = vlaneseq
        %v375 = vshrl.u32 %v374, 7
        %v376 = vsub.s32 0, %v375
        %v377 = vrot.slane %v372, %v376
        %v395 = vunpack.c.l.b16 %v356
        %v396 = vunpack.c.l.b16 %v357
        %v397 = vunpack.c.l.b16 %v358
        %v398 = vunpack.c.l.b16 %v359
        %v399 = vunpack.c.l.b16 %v360
        %v400 = vunpack.c.l.b16 %v361
        %v401 = vunpack.c.l.b16 %v362
        %v402 = vunpack.c.l.b16 %v363
        %v403 = vunpack.c.l.b16 %v364
        %v404 = vunpack.c.l.b16 %v365
        %v405 = vunpack.c.l.b16 %v366
        %v406 = vunpack.c.l.b16 %v367
        %v407 = vunpack.c.l.b16 %v368
        %v408 = vunpack.c.l.b16 %v369
        %v409 = vunpack.c.l.b16 %v370
        %v410 = vunpack.c.l.b16 %v371
        %v411 = vpack.c.b16 %v396, %v395
        %v412 = vpack.c.b16 %v398, %v397
        %v413 = vpack.c.b16 %v400, %v399
        %v414 = vpack.c.b16 %v402, %v401
        %v415 = vpack.c.b16 %v404, %v403
        %v416 = vpack.c.b16 %v406, %v405
        %v417 = vpack.c.b16 %v408, %v407
        %v418 = vpack.c.b16 %v410, %v409
        %427 = vmatprep.subr.bf16.mxu0 0
        %428 = vmatpush1.bf16.msra.mxu0 %v418
        %429 = vmatprep.subr.bf16.mxu0 0
        %430 = vmatpush1.bf16.msra.mxu0 %v417
        %431 = vmatprep.subr.bf16.mxu0 0
        %432 = vmatpush1.bf16.msra.mxu0 %v416
        %433 = vmatprep.subr.bf16.mxu0 0
        %434 = vmatpush1.bf16.msra.mxu0 %v415
        %435 = vmatprep.subr.bf16.mxu0 0
        %436 = vmatpush1.bf16.msra.mxu0 %v414
        %437 = vmatprep.subr.bf16.mxu0 0
        %438 = vmatpush1.bf16.msra.mxu0 %v413
        %439 = vmatprep.subr.bf16.mxu0 0
        %440 = vmatpush1.bf16.msra.mxu0 %v412
        %441 = vmatprep.subr.bf16.mxu0 0
        %442 = vmatpush1.bf16.msra.mxu0 %v411
        %443 = vmatprep.subr.bf16.mxu0 0
        %444 = vmatpush2.bf16.msra.mxu0 0
        %445 = vmatprep.subr.bf16.mxu0 0
        %446 = vmatpush2.bf16.msra.mxu0 0
        %447 = vmatprep.subr.bf16.mxu0 0
        %448 = vmatpush2.bf16.msra.mxu0 0
        %449 = vmatprep.subr.bf16.mxu0 0
        %450 = vmatpush2.bf16.msra.mxu0 0
        %451 = vmatprep.subr.bf16.mxu0 0
        %452 = vmatpush2.bf16.msra.mxu0 0
        %453 = vmatprep.subr.bf16.mxu0 0
        %454 = vmatpush2.bf16.msra.mxu0 0
        %455 = vmatprep.subr.bf16.mxu0 0
        %456 = vmatpush2.bf16.msra.mxu0 0
        %457 = vmatprep.subr.bf16.mxu0 0
        %458 = vmatpush2.bf16.msra.mxu0 0
        %459 = vmatprep.mubr.bf16.mxu0 0
        %460 = vmatmul.mubr.bf16.gmra.mxu0 %v354
        %v461 = vpop.f32.mrf.mxu0
        %v462 = vadd.f32 %v377, %v461
        %v463 = vpop.f32.mrf.mxu0
        %v464 = vpop.f32.mrf.mxu0
        %v465 = vadd.f32 %v377, %v464
        %v466 = vpop.f32.mrf.mxu0
        %467 = vmatprep.mubr.bf16.mxu0 0
        %468 = vmatmul.mubr.bf16.gmra.mxu0 %v355
        %v469 = vpop.f32.mrf.mxu0
        %v470 = vadd.f32 %v377, %v469
        %v471 = vpop.f32.mrf.mxu0
        %v472 = vpop.f32.mrf.mxu0
        %v473 = vadd.f32 %v377, %v472
        %v474 = vpop.f32.mrf.mxu0
        %475 = vdwg.mxu0
        %v476 = vpack.c.bf16 %v465, %v462
        %v477 = vpack.c.bf16 %v473, %v470
        %v478 = vld [vmem:[%s3] sm:$0xf]
        %vm479 = vcmask 31744
        %v481 = vsel %vm479, %v478, 0
        %v484 = vsel %vm479, %v476, 0
        %486 = vmatprep.subr.bf16.mxu0 0
        %487 = vmatpush1.bf16.xpose.msra.mxu0 0
        %488 = vmatprep.subr.bf16.mxu0 0
        %489 = vmatpush1.bf16.xpose.msra.mxu0 0
        %490 = vmatprep.subr.bf16.mxu0 0
        %491 = vmatpush1.bf16.xpose.msra.mxu0 0
        %492 = vmatprep.subr.bf16.mxu0 0
        %493 = vmatpush1.bf16.xpose.msra.mxu0 0
        %494 = vmatprep.subr.bf16.mxu0 0
        %495 = vmatpush1.bf16.xpose.msra.mxu0 0
        %496 = vmatprep.subr.bf16.mxu0 0
        %497 = vmatpush1.bf16.xpose.msra.mxu0 0
        %498 = vmatprep.subr.bf16.mxu0 0
        %499 = vmatpush1.bf16.xpose.msra.mxu0 0
        %500 = vmatprep.subr.bf16.mxu0 0
        %501 = vmatpush1.bf16.xpose.msra.mxu0 %v484
        %502 = vmatprep.subr.bf16.mxu0 0
        %503 = vmatpush2.bf16.xpose.msra.mxu0 0
        %504 = vmatprep.subr.bf16.mxu0 0
        %505 = vmatpush2.bf16.xpose.msra.mxu0 0
        %506 = vmatprep.subr.bf16.mxu0 0
        %507 = vmatpush2.bf16.xpose.msra.mxu0 0
        %508 = vmatprep.subr.bf16.mxu0 0
        %509 = vmatpush2.bf16.xpose.msra.mxu0 0
        %510 = vmatprep.subr.bf16.mxu0 0
        %511 = vmatpush2.bf16.xpose.msra.mxu0 0
        %512 = vmatprep.subr.bf16.mxu0 0
        %513 = vmatpush2.bf16.xpose.msra.mxu0 0
        %514 = vmatprep.subr.bf16.mxu0 0
        %515 = vmatpush2.bf16.xpose.msra.mxu0 0
        %516 = vmatprep.subr.bf16.mxu0 0
        %517 = vmatpush2.bf16.xpose.msra.mxu0 0
        %518 = vmatprep.mubr.bf16.mxu0 0
        %519 = vmatmul.mubr.bf16.gmra.mxu0 %v481
        %v520 = vpop.f32.mrf.mxu0
        %v521 = vadd.f32 0.0, %v520
        %v522 = vpop.f32.mrf.mxu0
        %v523 = vpop.f32.mrf.mxu0
        %v524 = vpop.f32.mrf.mxu0
        %525 = vdwg.mxu0
        %v527 = vsel %vm479, %v477, 0
        %529 = vmatprep.subr.bf16.mxu0 0
        %530 = vmatpush1.bf16.xpose.msra.mxu0 0
        %531 = vmatprep.subr.bf16.mxu0 0
        %532 = vmatpush1.bf16.xpose.msra.mxu0 0
        %533 = vmatprep.subr.bf16.mxu0 0
        %534 = vmatpush1.bf16.xpose.msra.mxu0 0
        %535 = vmatprep.subr.bf16.mxu0 0
        %536 = vmatpush1.bf16.xpose.msra.mxu0 0
        %537 = vmatprep.subr.bf16.mxu0 0
        %538 = vmatpush1.bf16.xpose.msra.mxu0 0
        %539 = vmatprep.subr.bf16.mxu0 0
        %540 = vmatpush1.bf16.xpose.msra.mxu0 0
        %541 = vmatprep.subr.bf16.mxu0 0
        %542 = vmatpush1.bf16.xpose.msra.mxu0 0
        %543 = vmatprep.subr.bf16.mxu0 0
        %544 = vmatpush1.bf16.xpose.msra.mxu0 %v527
        %545 = vmatprep.subr.bf16.mxu0 0
        %546 = vmatpush2.bf16.xpose.msra.mxu0 0
        %547 = vmatprep.subr.bf16.mxu0 0
        %548 = vmatpush2.bf16.xpose.msra.mxu0 0
        %549 = vmatprep.subr.bf16.mxu0 0
        %550 = vmatpush2.bf16.xpose.msra.mxu0 0
        %551 = vmatprep.subr.bf16.mxu0 0
        %552 = vmatpush2.bf16.xpose.msra.mxu0 0
        %553 = vmatprep.subr.bf16.mxu0 0
        %554 = vmatpush2.bf16.xpose.msra.mxu0 0
        %555 = vmatprep.subr.bf16.mxu0 0
        %556 = vmatpush2.bf16.xpose.msra.mxu0 0
        %557 = vmatprep.subr.bf16.mxu0 0
        %558 = vmatpush2.bf16.xpose.msra.mxu0 0
        %559 = vmatprep.subr.bf16.mxu0 0
        %560 = vmatpush2.bf16.xpose.msra.mxu0 0
        %561 = vmatprep.mubr.bf16.mxu0 0
        %562 = vmatmul.mubr.bf16.gmra.mxu0 %v481
        %v563 = vpop.f32.mrf.mxu0
        %v564 = vadd.f32 0.0, %v563
        %v565 = vpop.f32.mrf.mxu0
        %v566 = vpop.f32.mrf.mxu0
        %v567 = vpop.f32.mrf.mxu0
        %568 = vdwg.mxu0
        %v569 = vmul.f32 %v521, 0.5
        %v570 = vmul.f32 %v564, 0.5
        %vm571 = vcmask 130048
        %v572 = vsel %vm571, %v569, -inf
        %573 = vmax.xlane.f32.xlu0 %v572
        %v574 = vpop.xlane.xlu0 %573
        %v575 = vsel %vm571, %v570, -inf
        %576 = vmax.xlane.f32.xlu0 %v575
        %v577 = vpop.xlane.xlu0 %576
        %v578 = vsub.f32 %v569, %v574
        %v579 = vsub.f32 %v570, %v577
        %v580 = vmul.f32 %v578, 1.442695
        %v581 = vpow.pop %v580
        %v582 = vmul.f32 %v579, 1.442695
        %v583 = vpow.pop %v582
        %v584 = vsel %vm571, %v581, 0.0
        %585 = vadd.xlane.f32.xlu0 %v584
        %v586 = vpop.xlane.xlu0 %585
        %v587 = vsel %vm571, %v583, 0.0
        %588 = vadd.xlane.f32.xlu0 %v587
        %v589 = vpop.xlane.xlu0 %588
        %v590 = vrcp.pop %v586
        %v591 = vmul.f32 %v581, %v590
        %v592 = vrcp.pop %v589
        %v593 = vmul.f32 %v583, %v592
        %594 = vst.msk [vmem:[%s339] sm:$0xff] %vm571, %v591
        %595 = vst.msk [vmem:[%s339 + $0x8] sm:$0xff] %vm571, %v593
        %v596 = vpack.c.bf16 %v591, %v591
        %v597 = vpack.c.bf16 %v593, %v593
        %v599 = vsel %vm571, %v596, 0
        %601 = vmatprep.subr.bf16.mxu0 0
        %602 = vmatpush1.bf16.msra.mxu0 0
        %603 = vmatprep.subr.bf16.mxu0 0
        %604 = vmatpush1.bf16.msra.mxu0 0
        %605 = vmatprep.subr.bf16.mxu0 0
        %606 = vmatpush1.bf16.msra.mxu0 0
        %607 = vmatprep.subr.bf16.mxu0 0
        %608 = vmatpush1.bf16.msra.mxu0 0
        %609 = vmatprep.subr.bf16.mxu0 0
        %610 = vmatpush1.bf16.msra.mxu0 0
        %611 = vmatprep.subr.bf16.mxu0 0
        %612 = vmatpush1.bf16.msra.mxu0 0
        %613 = vmatprep.subr.bf16.mxu0 0
        %614 = vmatpush1.bf16.msra.mxu0 0
        %615 = vmatprep.subr.bf16.mxu0 0
        %616 = vmatpush1.bf16.msra.mxu0 %v476
        %617 = vmatprep.subr.bf16.mxu0 0
        %618 = vmatpush2.bf16.msra.mxu0 0
        %619 = vmatprep.subr.bf16.mxu0 0
        %620 = vmatpush2.bf16.msra.mxu0 0
        %621 = vmatprep.subr.bf16.mxu0 0
        %622 = vmatpush2.bf16.msra.mxu0 0
        %623 = vmatprep.subr.bf16.mxu0 0
        %624 = vmatpush2.bf16.msra.mxu0 0
        %625 = vmatprep.subr.bf16.mxu0 0
        %626 = vmatpush2.bf16.msra.mxu0 0
        %627 = vmatprep.subr.bf16.mxu0 0
        %628 = vmatpush2.bf16.msra.mxu0 0
        %629 = vmatprep.subr.bf16.mxu0 0
        %630 = vmatpush2.bf16.msra.mxu0 0
        %631 = vmatprep.subr.bf16.mxu0 0
        %632 = vmatpush2.bf16.msra.mxu0 0
        %633 = vmatprep.mubr.bf16.mxu0 0
        %634 = vmatmul.mubr.bf16.gmra.mxu0 %v599
        %v635 = vpop.f32.mrf.mxu0
        %v636 = vadd.f32 0.0, %v635
        %v637 = vpop.f32.mrf.mxu0
        %v638 = vpop.f32.mrf.mxu0
        %v639 = vpop.f32.mrf.mxu0
        %640 = vdwg.mxu0
        %v642 = vsel %vm571, %v597, 0
        %644 = vmatprep.subr.bf16.mxu0 0
        %645 = vmatpush1.bf16.msra.mxu0 0
        %646 = vmatprep.subr.bf16.mxu0 0
        %647 = vmatpush1.bf16.msra.mxu0 0
        %648 = vmatprep.subr.bf16.mxu0 0
        %649 = vmatpush1.bf16.msra.mxu0 0
        %650 = vmatprep.subr.bf16.mxu0 0
        %651 = vmatpush1.bf16.msra.mxu0 0
        %652 = vmatprep.subr.bf16.mxu0 0
        %653 = vmatpush1.bf16.msra.mxu0 0
        %654 = vmatprep.subr.bf16.mxu0 0
        %655 = vmatpush1.bf16.msra.mxu0 0
        %656 = vmatprep.subr.bf16.mxu0 0
        %657 = vmatpush1.bf16.msra.mxu0 0
        %658 = vmatprep.subr.bf16.mxu0 0
        %659 = vmatpush1.bf16.msra.mxu0 %v477
        %660 = vmatprep.subr.bf16.mxu0 0
        %661 = vmatpush2.bf16.msra.mxu0 0
        %662 = vmatprep.subr.bf16.mxu0 0
        %663 = vmatpush2.bf16.msra.mxu0 0
        %664 = vmatprep.subr.bf16.mxu0 0
        %665 = vmatpush2.bf16.msra.mxu0 0
        %666 = vmatprep.subr.bf16.mxu0 0
        %667 = vmatpush2.bf16.msra.mxu0 0
        %668 = vmatprep.subr.bf16.mxu0 0
        %669 = vmatpush2.bf16.msra.mxu0 0
        %670 = vmatprep.subr.bf16.mxu0 0
        %671 = vmatpush2.bf16.msra.mxu0 0
        %672 = vmatprep.subr.bf16.mxu0 0
        %673 = vmatpush2.bf16.msra.mxu0 0
        %674 = vmatprep.subr.bf16.mxu0 0
        %675 = vmatpush2.bf16.msra.mxu0 0
        %676 = vmatprep.mubr.bf16.mxu0 0
        %677 = vmatmul.mubr.bf16.gmra.mxu0 %v642
        %v678 = vpop.f32.mrf.mxu0
        %v679 = vadd.f32 0.0, %v678
        %v680 = vpop.f32.mrf.mxu0
        %v681 = vpop.f32.mrf.mxu0
        %v682 = vpop.f32.mrf.mxu0
        %683 = vdwg.mxu0
        %v684 = vld [vmem:[%s4] sm:$0xff]
        %686 = vset.pattern.permute.xlu0 0
        %687 = vperm.xlu0 %686, %v684
        %v688 = vpop.permute.xlu0 %687
        %v690 = vmul.f32 %v636, %v688
        %v691 = vmul.f32 %v679, %v688
        %v692 = vld [vmem:[%s5] sm:$0xf]
        %v693 = vld [vmem:[%s5 + $0x4] sm:$0xf]
        %v694 = vpack.c.bf16 %v690, %v690
        %v695 = vpack.c.bf16 %v691, %v691
        %v698 = vunpack.c.l.b16 %v692
        %v699 = vunpack.c.l.b16 %v693
        %v700 = vpack.c.b16 %v699, %v698
        %v702 = vsel %vm479, %v700, 0
        %v705 = vsel %vm479, %v694, 0
        %707 = vmatprep.subr.bf16.mxu0 0
        %708 = vmatpush1.bf16.xpose.msra.mxu0 0
        %709 = vmatprep.subr.bf16.mxu0 0
        %710 = vmatpush1.bf16.xpose.msra.mxu0 0
        %711 = vmatprep.subr.bf16.mxu0 0
        %712 = vmatpush1.bf16.xpose.msra.mxu0 0
        %713 = vmatprep.subr.bf16.mxu0 0
        %714 = vmatpush1.bf16.xpose.msra.mxu0 0
        %715 = vmatprep.subr.bf16.mxu0 0
        %716 = vmatpush1.bf16.xpose.msra.mxu0 0
        %717 = vmatprep.subr.bf16.mxu0 0
        %718 = vmatpush1.bf16.xpose.msra.mxu0 0
        %719 = vmatprep.subr.bf16.mxu0 0
        %720 = vmatpush1.bf16.xpose.msra.mxu0 0
        %721 = vmatprep.subr.bf16.mxu0 0
        %722 = vmatpush1.bf16.xpose.msra.mxu0 %v705
        %723 = vmatprep.subr.bf16.mxu0 0
        %724 = vmatpush2.bf16.xpose.msra.mxu0 0
        %725 = vmatprep.subr.bf16.mxu0 0
        %726 = vmatpush2.bf16.xpose.msra.mxu0 0
        %727 = vmatprep.subr.bf16.mxu0 0
        %728 = vmatpush2.bf16.xpose.msra.mxu0 0
        %729 = vmatprep.subr.bf16.mxu0 0
        %730 = vmatpush2.bf16.xpose.msra.mxu0 0
        %731 = vmatprep.subr.bf16.mxu0 0
        %732 = vmatpush2.bf16.xpose.msra.mxu0 0
        %733 = vmatprep.subr.bf16.mxu0 0
        %734 = vmatpush2.bf16.xpose.msra.mxu0 0
        %735 = vmatprep.subr.bf16.mxu0 0
        %736 = vmatpush2.bf16.xpose.msra.mxu0 0
        %737 = vmatprep.subr.bf16.mxu0 0
        %738 = vmatpush2.bf16.xpose.msra.mxu0 0
        %739 = vmatprep.mubr.bf16.mxu0 0
        %740 = vmatmul.mubr.bf16.gmra.mxu0 %v702
        %v741 = vpop.f32.mrf.mxu0
        %v742 = vadd.f32 0.0, %v741
        %v743 = vpop.f32.mrf.mxu0
        %v744 = vpop.f32.mrf.mxu0
        %v745 = vadd.f32 0.0, %v744
        %v746 = vpop.f32.mrf.mxu0
        %747 = vdwg.mxu0
        %v749 = vsel %vm479, %v695, 0
        %751 = vmatprep.subr.bf16.mxu0 0
        %752 = vmatpush1.bf16.xpose.msra.mxu0 0
        %753 = vmatprep.subr.bf16.mxu0 0
        %754 = vmatpush1.bf16.xpose.msra.mxu0 0
        %755 = vmatprep.subr.bf16.mxu0 0
        %756 = vmatpush1.bf16.xpose.msra.mxu0 0
        %757 = vmatprep.subr.bf16.mxu0 0
        %758 = vmatpush1.bf16.xpose.msra.mxu0 0
        %759 = vmatprep.subr.bf16.mxu0 0
        %760 = vmatpush1.bf16.xpose.msra.mxu0 0
        %761 = vmatprep.subr.bf16.mxu0 0
        %762 = vmatpush1.bf16.xpose.msra.mxu0 0
        %763 = vmatprep.subr.bf16.mxu0 0
        %764 = vmatpush1.bf16.xpose.msra.mxu0 0
        %765 = vmatprep.subr.bf16.mxu0 0
        %766 = vmatpush1.bf16.xpose.msra.mxu0 %v749
        %767 = vmatprep.subr.bf16.mxu0 0
        %768 = vmatpush2.bf16.xpose.msra.mxu0 0
        %769 = vmatprep.subr.bf16.mxu0 0
        %770 = vmatpush2.bf16.xpose.msra.mxu0 0
        %771 = vmatprep.subr.bf16.mxu0 0
        %772 = vmatpush2.bf16.xpose.msra.mxu0 0
        %773 = vmatprep.subr.bf16.mxu0 0
        %774 = vmatpush2.bf16.xpose.msra.mxu0 0
        %775 = vmatprep.subr.bf16.mxu0 0
        %776 = vmatpush2.bf16.xpose.msra.mxu0 0
        %777 = vmatprep.subr.bf16.mxu0 0
        %778 = vmatpush2.bf16.xpose.msra.mxu0 0
        %779 = vmatprep.subr.bf16.mxu0 0
        %780 = vmatpush2.bf16.xpose.msra.mxu0 0
        %781 = vmatprep.subr.bf16.mxu0 0
        %782 = vmatpush2.bf16.xpose.msra.mxu0 0
        %783 = vmatprep.mubr.bf16.mxu0 0
        %784 = vmatmul.mubr.bf16.gmra.mxu0 %v702
        %v785 = vpop.f32.mrf.mxu0
        %v786 = vadd.f32 0.0, %v785
        %v787 = vpop.f32.mrf.mxu0
        %v788 = vpop.f32.mrf.mxu0
        %v789 = vadd.f32 0.0, %v788
        %v790 = vpop.f32.mrf.mxu0
        %791 = vdwg.mxu0
        %v792 = vmul.f32 %v742, 0.5
        %v793 = vmul.f32 %v745, 0.5
        %v794 = vmul.f32 %v786, 0.5
        %v795 = vmul.f32 %v789, 0.5
        %vm796 = vcmask 64512
        %v797 = vsel %vm796, %v792, -inf
        %798 = vmax.xlane.f32.xlu0 %v797
        %v799 = vpop.xlane.xlu0 %798
        %v800 = vsel %vm796, %v793, -inf
        %801 = vmax.xlane.f32.xlu0 %v800
        %v802 = vpop.xlane.xlu0 %801
        %v803 = vsel %vm796, %v794, -inf
        %804 = vmax.xlane.f32.xlu0 %v803
        %v805 = vpop.xlane.xlu0 %804
        %v806 = vsel %vm796, %v795, -inf
        %807 = vmax.xlane.f32.xlu0 %v806
        %v808 = vpop.xlane.xlu0 %807
        %v809 = vsub.f32 %v792, %v799
        %v810 = vsub.f32 %v793, %v802
        %v811 = vsub.f32 %v794, %v805
        %v812 = vsub.f32 %v795, %v808
        %v813 = vmul.f32 %v809, 1.442695
        %v814 = vpow.pop %v813
        %v815 = vmul.f32 %v810, 1.442695
        %v816 = vpow.pop %v815
        %v817 = vmul.f32 %v811, 1.442695
        %v818 = vpow.pop %v817
        %v819 = vmul.f32 %v812, 1.442695
        %v820 = vpow.pop %v819
        %v821 = vsel %vm796, %v814, 0.0
        %822 = vadd.xlane.f32.xlu0 %v821
        %v823 = vpop.xlane.xlu0 %822
        %v824 = vsel %vm796, %v816, 0.0
        %825 = vadd.xlane.f32.xlu0 %v824
        %v826 = vpop.xlane.xlu0 %825
        %v827 = vsel %vm796, %v818, 0.0
        %828 = vadd.xlane.f32.xlu0 %v827
        %v829 = vpop.xlane.xlu0 %828
        %v830 = vsel %vm796, %v820, 0.0
        %831 = vadd.xlane.f32.xlu0 %v830
        %v832 = vpop.xlane.xlu0 %831
        %v833 = vrcp.pop %v823
        %v834 = vrcp.pop %v826
        %v835 = vrcp.pop %v829
        %v836 = vrcp.pop %v832
        %v837 = vmul.f32 %v814, %v833
        %v838 = vmul.f32 %v816, %v834
        %v839 = vmul.f32 %v818, %v835
        %v840 = vmul.f32 %v820, %v836
        %v841 = vpack.c.bf16 %v838, %v837
        %v842 = vpack.c.bf16 %v840, %v839
        %v844 = vsel %vm796, %v841, 0
        %vm846 = vcmask 1043456
        %v847 = vsel %vm846, %v694, 0
        %849 = vmatprep.subr.bf16.mxu0 0
        %850 = vmatpush1.bf16.msra.mxu0 0
        %851 = vmatprep.subr.bf16.mxu0 0
        %852 = vmatpush1.bf16.msra.mxu0 0
        %853 = vmatprep.subr.bf16.mxu0 0
        %854 = vmatpush1.bf16.msra.mxu0 0
        %855 = vmatprep.subr.bf16.mxu0 0
        %856 = vmatpush1.bf16.msra.mxu0 0
        %857 = vmatprep.subr.bf16.mxu0 0
        %858 = vmatpush1.bf16.msra.mxu0 0
        %859 = vmatprep.subr.bf16.mxu0 0
        %860 = vmatpush1.bf16.msra.mxu0 0
        %861 = vmatprep.subr.bf16.mxu0 0
        %862 = vmatpush1.bf16.msra.mxu0 0
        %863 = vmatprep.subr.bf16.mxu0 0
        %864 = vmatpush1.bf16.msra.mxu0 %v847
        %865 = vmatprep.subr.bf16.mxu0 0
        %866 = vmatpush2.bf16.msra.mxu0 0
        %867 = vmatprep.subr.bf16.mxu0 0
        %868 = vmatpush2.bf16.msra.mxu0 0
        %869 = vmatprep.subr.bf16.mxu0 0
        %870 = vmatpush2.bf16.msra.mxu0 0
        %871 = vmatprep.subr.bf16.mxu0 0
        %872 = vmatpush2.bf16.msra.mxu0 0
        %873 = vmatprep.subr.bf16.mxu0 0
        %874 = vmatpush2.bf16.msra.mxu0 0
        %875 = vmatprep.subr.bf16.mxu0 0
        %876 = vmatpush2.bf16.msra.mxu0 0
        %877 = vmatprep.subr.bf16.mxu0 0
        %878 = vmatpush2.bf16.msra.mxu0 0
        %879 = vmatprep.subr.bf16.mxu0 0
        %880 = vmatpush2.bf16.msra.mxu0 0
        %881 = vmatprep.mubr.bf16.mxu0 0
        %882 = vmatmul.mubr.bf16.gmra.mxu0 %v844
        %v883 = vpop.f32.mrf.mxu0
        %v884 = vadd.f32 0.0, %v883
        %v885 = vpop.f32.mrf.mxu0
        %v886 = vpop.f32.mrf.mxu0
        %v887 = vadd.f32 0.0, %v886
        %v888 = vpop.f32.mrf.mxu0
        %889 = vdwg.mxu0
        %v891 = vsel %vm796, %v842, 0
        %v893 = vsel %vm846, %v695, 0
        %895 = vmatprep.subr.bf16.mxu0 0
        %896 = vmatpush1.bf16.msra.mxu0 0
        %897 = vmatprep.subr.bf16.mxu0 0
        %898 = vmatpush1.bf16.msra.mxu0 0
        %899 = vmatprep.subr.bf16.mxu0 0
        %900 = vmatpush1.bf16.msra.mxu0 0
        %901 = vmatprep.subr.bf16.mxu0 0
        %902 = vmatpush1.bf16.msra.mxu0 0
        %903 = vmatprep.subr.bf16.mxu0 0
        %904 = vmatpush1.bf16.msra.mxu0 0
        %905 = vmatprep.subr.bf16.mxu0 0
        %906 = vmatpush1.bf16.msra.mxu0 0
        %907 = vmatprep.subr.bf16.mxu0 0
        %908 = vmatpush1.bf16.msra.mxu0 0
        %909 = vmatprep.subr.bf16.mxu0 0
        %910 = vmatpush1.bf16.msra.mxu0 %v893
        %911 = vmatprep.subr.bf16.mxu0 0
        %912 = vmatpush2.bf16.msra.mxu0 0
        %913 = vmatprep.subr.bf16.mxu0 0
        %914 = vmatpush2.bf16.msra.mxu0 0
        %915 = vmatprep.subr.bf16.mxu0 0
        %916 = vmatpush2.bf16.msra.mxu0 0
        %917 = vmatprep.subr.bf16.mxu0 0
        %918 = vmatpush2.bf16.msra.mxu0 0
        %919 = vmatprep.subr.bf16.mxu0 0
        %920 = vmatpush2.bf16.msra.mxu0 0
        %921 = vmatprep.subr.bf16.mxu0 0
        %922 = vmatpush2.bf16.msra.mxu0 0
        %923 = vmatprep.subr.bf16.mxu0 0
        %924 = vmatpush2.bf16.msra.mxu0 0
        %925 = vmatprep.subr.bf16.mxu0 0
        %926 = vmatpush2.bf16.msra.mxu0 0
        %927 = vmatprep.mubr.bf16.mxu0 0
        %928 = vmatmul.mubr.bf16.gmra.mxu0 %v891
        %v929 = vpop.f32.mrf.mxu0
        %v930 = vadd.f32 0.0, %v929
        %v931 = vpop.f32.mrf.mxu0
        %v932 = vpop.f32.mrf.mxu0
        %v933 = vadd.f32 0.0, %v932
        %v934 = vpop.f32.mrf.mxu0
        %935 = vdwg.mxu0
        %v936 = vpack.c.bf16 %v887, %v884
        %v937 = vpack.c.bf16 %v933, %v930
        %v938 = vld [vmem:[%s6] sm:$0x3]
        %v939 = vld [vmem:[%s7] sm:$0x1]
        %v941 = vlaneseq
        %v942 = vshrl.u32 %v941, 7
        %v943 = vsub.s32 0, %v942
        %v944 = vrot.slane %v939, %v943
        %v947 = vsel %vm479, %v936, 0
        %v950 = vsel %vm479, %v937, 0
        %vm952 = vcmask 1041408
        %v954 = vsel %vm952, %v938, 0
        %956 = vmatprep.subr.bf16.mxu0 0
        %957 = vmatpush1.bf16.msra.mxu0 0
        %958 = vmatprep.subr.bf16.mxu0 0
        %959 = vmatpush1.bf16.msra.mxu0 0
        %960 = vmatprep.subr.bf16.mxu0 0
        %961 = vmatpush1.bf16.msra.mxu0 0
        %962 = vmatprep.subr.bf16.mxu0 0
        %963 = vmatpush1.bf16.msra.mxu0 0
        %964 = vmatprep.subr.bf16.mxu0 0
        %965 = vmatpush1.bf16.msra.mxu0 0
        %966 = vmatprep.subr.bf16.mxu0 0
        %967 = vmatpush1.bf16.msra.mxu0 0
        %968 = vmatprep.subr.bf16.mxu0 0
        %969 = vmatpush1.bf16.msra.mxu0 0
        %970 = vmatprep.subr.bf16.mxu0 0
        %971 = vmatpush1.bf16.msra.mxu0 %v954
        %972 = vmatprep.subr.bf16.mxu0 0
        %973 = vmatpush2.bf16.msra.mxu0 0
        %974 = vmatprep.subr.bf16.mxu0 0
        %975 = vmatpush2.bf16.msra.mxu0 0
        %976 = vmatprep.subr.bf16.mxu0 0
        %977 = vmatpush2.bf16.msra.mxu0 0
        %978 = vmatprep.subr.bf16.mxu0 0
        %979 = vmatpush2.bf16.msra.mxu0 0
        %980 = vmatprep.subr.bf16.mxu0 0
        %981 = vmatpush2.bf16.msra.mxu0 0
        %982 = vmatprep.subr.bf16.mxu0 0
        %983 = vmatpush2.bf16.msra.mxu0 0
        %984 = vmatprep.subr.bf16.mxu0 0
        %985 = vmatpush2.bf16.msra.mxu0 0
        %986 = vmatprep.subr.bf16.mxu0 0
        %987 = vmatpush2.bf16.msra.mxu0 0
        %988 = vmatprep.mubr.bf16.mxu0 0
        %989 = vmatmul.mubr.bf16.gmra.mxu0 %v947
        %v990 = vpop.f32.mrf.mxu0
        %v991 = vadd.f32 %v944, %v990
        %v992 = vpop.f32.mrf.mxu0
        %v993 = vpop.f32.mrf.mxu0
        %v994 = vadd.f32 %v944, %v993
        %v995 = vpop.f32.mrf.mxu0
        %996 = vmatprep.mubr.bf16.mxu0 0
        %997 = vmatmul.mubr.bf16.gmra.mxu0 %v950
        %v998 = vpop.f32.mrf.mxu0
        %v999 = vadd.f32 %v944, %v998
        %v1000 = vpop.f32.mrf.mxu0
        %v1001 = vpop.f32.mrf.mxu0
        %v1002 = vadd.f32 %v944, %v1001
        %v1003 = vpop.f32.mrf.mxu0
        %1004 = vdwg.mxu0
        %1005 = vst [vmem:[%s332] sm:$0xff] %v991
        %1006 = vst [vmem:[%s332 + $0x8] sm:$0xff] %v994
        %1007 = vst [vmem:[%s332 + $0x10] sm:$0xff] %v999
        %1008 = vst [vmem:[%s332 + $0x18] sm:$0xff] %v1002
        %s1009 = sand.u32 %s208, 1
        %s1010 = scalar_lea.sflag [#allocation3], %s1009
        %s1011 = sand.u32 %s208, 1
        %s1012 = smul.addr %s1011, 32
        %s1013 = scalar_lea.vmem [#allocation2], %s1012
        %s1014 = sand.u32 %s234, 1
        %s1015 = scalar_lea.sflag [#allocation5], %s1014
        %s1016 = sand.u32 %s234, 1
        %s1017 = smul.addr %s1016, 16
        %s1018 = scalar_lea.vmem [#allocation4], %s1017
        // Predicated region
        $region53: #{tpu_custom_call.1} parent=51 // pred_check
          %p1019 = pneg %p218
        $region54: #{tpu_custom_call.1} parent=51 // pred_check_branch
          %1021 = sbr.rel (%p1019) target = $region56
        $region55: #{tpu_custom_call.1} parent=51 // pred_region
          %s1022 = smul.u32 2, %s27
          %s1024 = ssub.s32 512, 512
          %1025 = vsyncadd %s1010, %s1024
          %s1026 = smul.addr %s1022, 2
          %s1027 = smul.addr %s1026, 128
          %s1028 = scalar_lea.hbm %s8, %s1027
          %s1029 = sshll.u32 %s1013, 4
          %s1030 = int_to_ptr.vmem [resolvable:$true] %s1029
          %1035 = dma.vmem_to_hbm [thread:$0]  %s1030, 512, %s1028, %s1010, 128, 128, 8
        $region56: #{tpu_custom_call.1} parent=51 // pred_fallthru
          _
        // Predicated region
        $region57: #{tpu_custom_call.1} parent=51 // pred_check
          %p1036 = pneg %p244
        $region58: #{tpu_custom_call.1} parent=51 // pred_check_branch
          %1038 = sbr.rel (%p1036) target = $region60
        $region59: #{tpu_custom_call.1} parent=51 // pred_region
          %s1039 = smul.u32 2, %s27
          %s1041 = ssub.s32 256, 256
          %1042 = vsyncadd %s1015, %s1041
          %s1043 = smul.addr %s1039, 128
          %s1044 = scalar_lea.hbm %s9, %s1043
          %s1045 = sshll.u32 %s1018, 4
          %s1046 = int_to_ptr.vmem [resolvable:$true] %s1045
          %1051 = dma.vmem_to_hbm [thread:$0]  %s1046, 256, %s1044, %s1015, 128, 128, 8
        $region60: #{tpu_custom_call.1} parent=51 // pred_fallthru
          _
      $region52: #{tpu_custom_call.1} parent=5 // pred_fallthru
        _
      %p1052 = scmp.le.s32.totalorder 2, %s22
      // Predicated region
      $region61: #{tpu_custom_call.1} parent=5 // pred_check
        %p1053 = pneg %p1052
      $region62: #{tpu_custom_call.1} parent=5 // pred_check_branch
        %1055 = sbr.rel (%p1053) target = $region64
      $region63: #{tpu_custom_call.1} parent=5 // pred_region
        %s1056 = ssub.s32 %s22, 2
        // Predicated region
        $region65: #{tpu_custom_call.1} parent=63 // pred_check
          %p1057 = pneg %p224
        $region66: #{tpu_custom_call.1} parent=63 // pred_check_branch
          %1059 = sbr.rel (%p1057) target = $region68
        $region67: #{tpu_custom_call.1} parent=63 // pred_region
          %s1060 = sand.u32 %s209, 1
          %s1061 = scalar_lea.sflag [#allocation3], %s1060
          %s1062 = sand.u32 %s209, 1
          %s1063 = smul.addr %s1062, 32
          %s1064 = scalar_lea.vmem [#allocation2], %s1063
          %1065 = dma.done %s1061, 512
        $region68: #{tpu_custom_call.1} parent=63 // pred_fallthru
          _
        // Predicated region
        $region69: #{tpu_custom_call.1} parent=63 // pred_check
          %p1066 = pneg %p250
        $region70: #{tpu_custom_call.1} parent=63 // pred_check_branch
          %1068 = sbr.rel (%p1066) target = $region72
        $region71: #{tpu_custom_call.1} parent=63 // pred_region
          %s1069 = sand.u32 %s235, 1
          %s1070 = scalar_lea.sflag [#allocation5], %s1069
          %s1071 = sand.u32 %s235, 1
          %s1072 = smul.addr %s1071, 16
          %s1073 = scalar_lea.vmem [#allocation4], %s1072
          %1074 = dma.done %s1070, 256
        $region72: #{tpu_custom_call.1} parent=63 // pred_fallthru
          _
      $region64: #{tpu_custom_call.1} parent=5 // pred_fallthru
        _
    $region6: #{tpu_custom_call.1} parent=1 // loop_footer
      %s26 = sadd.s32 1, %s22
    $region7: #{tpu_custom_call.1} parent=1 // loop_footer_branch
      %21 = sbr.rel target = $region3
    $region8: #{tpu_custom_call.1} parent=1 // loop_exit
      _
    %1075 = vsyncpa [#allocation3], 1
    %s1076 = scalar_lea.sflag [#allocation3], 1
    %1077 = vsyncpa %s1076, 1
    %1078 = vsyncpa [#allocation5], 1
    %s1079 = scalar_lea.sflag [#allocation5], 1
    %1080 = vsyncpa %s1079, 1

</llo_original>
